<compile_context>
chip_gen: v6e
topology: v6e:2x2x1
jax: 0.10.0
libtpu: 0.0.40
codegen_flags: <defaults>
</compile_context>

<pallas_src>
import functools

import jax
import jax.numpy as jnp
from jax import lax
from jax.experimental import pallas as pl
from jax.experimental.pallas import tpu as pltpu

LANE = 128        # vreg lane width / MXU alignment
SUBLANE_BF16 = 16  # bf16 sublane packing


def _rup(n, m):
    return ((n + m - 1) // m) * m


def _pad2d(a, rows, cols):
    r, c = a.shape
    return jnp.pad(a, ((0, rows - r), (0, cols - c)))


def mlp_kernel(x_ref, w1_ref, b1_ref, w2_ref, b2_ref, wo_ref, bo_ref, o_ref,
               *, out_valid, out_padded):
    # Activation tile for this grid step; already bf16 (cast in the wrapper),
    # f32 accumulation on the MXU.
    x = x_ref[...]

    # fc1 + ReLU
    h = jnp.dot(x, w1_ref[...], preferred_element_type=jnp.float32) + b1_ref[...]
    h = jnp.maximum(h, 0.0)

    # fc2 + ReLU (first application)
    h = jnp.dot(h.astype(jnp.bfloat16), w2_ref[...],
                preferred_element_type=jnp.float32) + b2_ref[...]
    h = jnp.maximum(h, 0.0)

    # fc2 + ReLU (second application, as in the PyTorch forward)
    h = jnp.dot(h.astype(jnp.bfloat16), w2_ref[...],
                preferred_element_type=jnp.float32) + b2_ref[...]
    h = jnp.maximum(h, 0.0)

    # output layer
    logits = jnp.dot(h.astype(jnp.bfloat16), wo_ref[...],
                     preferred_element_type=jnp.float32) + bo_ref[...]

    # Numerically stable softmax over dim=1.  The lane-padding mask is skipped
    # statically when there is no padding (out_valid is a trace-time constant).
    if out_valid != out_padded:
        col = lax.broadcasted_iota(jnp.int32, logits.shape, 1)
        logits = jnp.where(col < out_valid, logits, jnp.float32(-1e30))
    m = jnp.max(logits, axis=1, keepdims=True)
    e = jnp.exp(logits - m)                       # padded cols underflow to 0
    s = jnp.sum(e, axis=1, keepdims=True)
    # Exact division (not approx reciprocal) so rows sum to 1 within f32 eps.
    o_ref[...] = (e / s).astype(o_ref.dtype)


def mlp_forward(x, params, *, block_batch=1024):
    """x: (B, input_size) f32. params: weights stored transposed as (in, out)."""
    B, input_size = x.shape
    w1, b1 = params["w1"], params["b1"]
    w2, b2 = params["w2"], params["b2"]
    wo, bo = params["wo"], params["bo"]

    h1 = w1.shape[1]
    h2 = w2.shape[1]
    h3 = wo.shape[0]
    output_size = wo.shape[1]
    assert w1.shape[0] == input_size
    assert w2.shape[0] == h1 and h1 == h2, "fc2 applied twice requires h1 == h2"
    assert h2 == h3, "`out` consumes fc2's output; requires h2 == h3"

    # Pad hidden / output dims to the 128-lane width (lane-dense matmuls and
    # unmasked stores).  x's feature dim is left unpadded: a full-extent block
    # satisfies the (8,128) rule and avoids an inflated HBM activation copy.
    hid_p = _rup(h1, LANE)
    out_p = _rup(output_size, LANE)

    # Batch tile: multiple of 16 (bf16 sublane packing), capped at block_batch,
    # and chosen so there are >=2 grid steps when the batch is big enough
    # (lets "parallel" shard across both TensorCores on v7x).
    tb = min(block_batch, max(SUBLANE_BF16, _rup(pl.cdiv(B, 2), SUBLANE_BF16)))
    b_p = _rup(B, tb)
    grid = (b_p // tb,)

    # Wrapper-side padding / casting.  x: pad batch only, stream as bf16 (the
    # cast is folded into the pad rewrite).  Weights bf16, biases f32.
    x_p = jnp.pad(x, ((0, b_p - B), (0, 0))).astype(jnp.bfloat16)
    w1_p = _pad2d(w1, input_size, hid_p).astype(jnp.bfloat16)
    w2_p = _pad2d(w2, hid_p, hid_p).astype(jnp.bfloat16)
    wo_p = _pad2d(wo, hid_p, out_p).astype(jnp.bfloat16)
    b1_p = _pad2d(b1, 1, hid_p)
    b2_p = _pad2d(b2, 1, hid_p)
    bo_p = _pad2d(bo, 1, out_p)

    const = lambda i: (0, 0)  # weights / biases: same block every grid step

    # Explicit VMEM budget: resident weights/biases (x2 for default
    # double-buffering of constant-index blocks), pipelined x/out tiles, plus
    # headroom for intermediates.  Capped so it fits every generation (v7x has
    # 64 MiB physical per TensorCore).
    weight_bytes = (w1_p.size + w2_p.size + wo_p.size) * 2
    bias_bytes = (b1_p.size + b2_p.size + bo_p.size) * 4
    tile_bytes = tb * input_size * 2 + tb * out_p * 4 + tb * hid_p * 4
    vmem_limit = 2 * (weight_bytes + bias_bytes) + 2 * tile_bytes + (8 << 20)
    vmem_limit = int(min(max(vmem_limit, 16 << 20), 64 << 20))

    flops = 2 * b_p * (input_size * hid_p + 2 * hid_p * hid_p + hid_p * out_p)
    bytes_accessed = (
        x_p.size * 2 + b_p * out_p * 4       # activations in (bf16) / out (f32)
        + weight_bytes + bias_bytes)
    cost = pl.CostEstimate(flops=flops,
                           transcendentals=b_p * out_p,   # exp in the softmax
                           bytes_accessed=bytes_accessed)

    out_full = pl.pallas_call(
        functools.partial(mlp_kernel, out_valid=output_size, out_padded=out_p),
        out_shape=jax.ShapeDtypeStruct((b_p, out_p), jnp.float32),
        grid=grid,
        in_specs=[
            pl.BlockSpec((tb, input_size), lambda i: (i, 0)),  # x: pipelined batch
            pl.BlockSpec((input_size, hid_p), const),          # w1 (VMEM-resident)
            pl.BlockSpec((1, hid_p), const),                   # b1
            pl.BlockSpec((hid_p, hid_p), const),               # w2
            pl.BlockSpec((1, hid_p), const),                   # b2
            pl.BlockSpec((hid_p, out_p), const),               # wo
            pl.BlockSpec((1, out_p), const),                   # bo
        ],
        out_specs=pl.BlockSpec((tb, out_p), lambda i: (i, 0)),
        compiler_params=pltpu.CompilerParams(
            # Batch tiles are independent -> shard across TensorCores on v7x.
            dimension_semantics=("parallel",),
            vmem_limit_bytes=vmem_limit),
        cost_estimate=cost,
    )(x_p, w1_p, b1_p, w2_p, b2_p, wo_p, bo_p)

    # TODO(synk): for hidden sizes where the resident bf16 weights exceed
    # ~20-25 MiB (v7x: hid_p ~ 4096), add a K-reduction grid axis ("arbitrary",
    # last) with an f32 VMEM accumulator, and single-buffer the constant-index
    # weight blocks (pipeline_mode=pl.Buffered(1)) to halve resident VMEM.
    return out_full[:B, :output_size]


def init_params(key, input_size, hidden_size1, hidden_size2, hidden_size3,
                output_size):
    """Deterministic init mimicking nn.Linear's uniform(-1/sqrt(in), 1/sqrt(in)).

    Weights are stored transposed, shape (in_features, out_features)."""
    def linear(k, fan_in, fan_out):
        kw, kb = jax.random.split(k)
        bound = 1.0 / jnp.sqrt(fan_in)
        w = jax.random.uniform(kw, (fan_in, fan_out), jnp.float32, -bound, bound)
        b = jax.random.uniform(kb, (1, fan_out), jnp.float32, -bound, bound)
        return w, b

    k1, k2, k3, k4 = jax.random.split(key, 4)
    w1, b1 = linear(k1, input_size, hidden_size1)
    w2, b2 = linear(k2, hidden_size1, hidden_size2)
    w3, b3 = linear(k3, hidden_size2, hidden_size3)   # fc3: created, unused (matches PyTorch)
    wo, bo = linear(k4, hidden_size3, output_size)
    return {"w1": w1, "b1": b1, "w2": w2, "b2": b2,
            "w3": w3, "b3": b3, "wo": wo, "bo": bo}


def mlp_reference(x, params):
    """Pure-JAX f32 reference of the PyTorch forward (fc2 applied twice)."""
    h = jax.nn.relu(x @ params["w1"] + params["b1"])
    h = jax.nn.relu(h @ params["w2"] + params["b2"])
    h = jax.nn.relu(h @ params["w2"] + params["b2"])
    logits = h @ params["wo"] + params["bo"]
    return jax.nn.softmax(logits, axis=1)


if __name__ == "__main__":
    # Shapes consistent with the forward pass: h1 == h2 (fc2 applied twice)
    # and h2 == h3 (`out` consumes fc2's output).
    batch = 8
    input_size = 32
    hidden_size1 = 64
    hidden_size2 = 64
    hidden_size3 = 64
    output_size = 16

    key = jax.random.PRNGKey(0)
    kx, kp = jax.random.split(key)
    x = jax.random.normal(kx, (batch, input_size), dtype=jnp.float32)
    params = init_params(kp, input_size, hidden_size1, hidden_size2,
                         hidden_size3, output_size)

    out = mlp_forward(x, params)
    out = jax.block_until_ready(out)

    # Sanity checks: correct shape, finite, softmax rows sum to ~1 (exact f32
    # normalization in-kernel), and agreement with the f32 reference within
    # the bf16-matmul tolerance.
    assert out.shape == (batch, output_size)
    assert bool(jnp.all(jnp.isfinite(out)))
    assert jnp.allclose(jnp.sum(out, axis=1), 1.0, atol=1e-4)
    ref = mlp_reference(x, params)
    assert jnp.allclose(out, ref, atol=2e-2)

    print("KERNEL_OK")
</pallas_src>

<mosaic_0001>
module attributes {stable_mosaic.version = 11 : i64} {
  func.func @mlp_kernel(%arg0: i32, %arg1: memref<16x32xbf16, #tpu.memory_space<vmem>>, %arg2: memref<32x128xbf16, #tpu.memory_space<vmem>>, %arg3: memref<1x128xf32, #tpu.memory_space<vmem>>, %arg4: memref<128x128xbf16, #tpu.memory_space<vmem>>, %arg5: memref<1x128xf32, #tpu.memory_space<vmem>>, %arg6: memref<128x128xbf16, #tpu.memory_space<vmem>>, %arg7: memref<1x128xf32, #tpu.memory_space<vmem>>, %arg8: memref<16x128xf32, #tpu.memory_space<vmem>>) attributes {dimension_semantics = [#tpu.dimension_semantics<parallel>], iteration_bounds = array<i64: 1>, scalar_prefetch = 0 : i64, scratch_operands = 0 : i64, tpu.core_type = #tpu.core_type<tc>, window_params = [{transform_indices = @transform_0, window_bounds = array<i64: 16, 32>}, {pipeline_mode = #tpu.pipeline_mode<synchronous>, transform_indices = @transform_1, window_bounds = array<i64: 32, 128>}, {pipeline_mode = #tpu.pipeline_mode<synchronous>, transform_indices = @transform_2, window_bounds = array<i64: 1, 128>}, {pipeline_mode = #tpu.pipeline_mode<synchronous>, transform_indices = @transform_3, window_bounds = array<i64: 128, 128>}, {pipeline_mode = #tpu.pipeline_mode<synchronous>, transform_indices = @transform_4, window_bounds = array<i64: 1, 128>}, {pipeline_mode = #tpu.pipeline_mode<synchronous>, transform_indices = @transform_5, window_bounds = array<i64: 128, 128>}, {pipeline_mode = #tpu.pipeline_mode<synchronous>, transform_indices = @transform_6, window_bounds = array<i64: 1, 128>}, {transform_indices = @transform_7, window_bounds = array<i64: 16, 128>}]} {
    %c0 = arith.constant 0 : index
    %c0_0 = arith.constant 0 : index
    %0 = vector.load %arg1[%c0, %c0_0] : memref<16x32xbf16, #tpu.memory_space<vmem>>, vector<16x32xbf16>
    %c0_1 = arith.constant 0 : index
    %c0_2 = arith.constant 0 : index
    %1 = vector.load %arg2[%c0_1, %c0_2] : memref<32x128xbf16, #tpu.memory_space<vmem>>, vector<32x128xbf16>
    %cst = arith.constant dense<0.000000e+00> : vector<16x128xf32>
    %2 = tpu.matmul %0, %1, %cst {dimension_numbers = #tpu.dot_dimension_numbers<[1], [0], [0], [1], [0, 0, 1, 1], [], []>} : vector<16x32xbf16>, vector<32x128xbf16>, vector<16x128xf32> -> vector<16x128xf32>
    %c0_3 = arith.constant 0 : index
    %c0_4 = arith.constant 0 : index
    %3 = vector.load %arg3[%c0_3, %c0_4] : memref<1x128xf32, #tpu.memory_space<vmem>>, vector<1x128xf32>
    %4 = vector.broadcast %3 : vector<1x128xf32> to vector<16x128xf32>
    %5 = arith.addf %2, %4 : vector<16x128xf32>
    %cst_5 = arith.constant 0.000000e+00 : f32
    %6 = vector.broadcast %cst_5 : f32 to vector<16x128xf32>
    %7 = arith.maximumf %5, %6 : vector<16x128xf32>
    %8 = arith.truncf %7 : vector<16x128xf32> to vector<16x128xbf16>
    %c0_6 = arith.constant 0 : index
    %c0_7 = arith.constant 0 : index
    %9 = vector.load %arg4[%c0_6, %c0_7] : memref<128x128xbf16, #tpu.memory_space<vmem>>, vector<128x128xbf16>
    %cst_8 = arith.constant dense<0.000000e+00> : vector<16x128xf32>
    %10 = tpu.matmul %8, %9, %cst_8 {dimension_numbers = #tpu.dot_dimension_numbers<[1], [0], [0], [1], [0, 0, 1, 1], [], []>} : vector<16x128xbf16>, vector<128x128xbf16>, vector<16x128xf32> -> vector<16x128xf32>
    %c0_9 = arith.constant 0 : index
    %c0_10 = arith.constant 0 : index
    %11 = vector.load %arg5[%c0_9, %c0_10] : memref<1x128xf32, #tpu.memory_space<vmem>>, vector<1x128xf32>
    %12 = vector.broadcast %11 : vector<1x128xf32> to vector<16x128xf32>
    %13 = arith.addf %10, %12 : vector<16x128xf32>
    %cst_11 = arith.constant 0.000000e+00 : f32
    %14 = vector.broadcast %cst_11 : f32 to vector<16x128xf32>
    %15 = arith.maximumf %13, %14 : vector<16x128xf32>
    %16 = arith.truncf %15 : vector<16x128xf32> to vector<16x128xbf16>
    %c0_12 = arith.constant 0 : index
    %c0_13 = arith.constant 0 : index
    %17 = vector.load %arg4[%c0_12, %c0_13] : memref<128x128xbf16, #tpu.memory_space<vmem>>, vector<128x128xbf16>
    %cst_14 = arith.constant dense<0.000000e+00> : vector<16x128xf32>
    %18 = tpu.matmul %16, %17, %cst_14 {dimension_numbers = #tpu.dot_dimension_numbers<[1], [0], [0], [1], [0, 0, 1, 1], [], []>} : vector<16x128xbf16>, vector<128x128xbf16>, vector<16x128xf32> -> vector<16x128xf32>
    %c0_15 = arith.constant 0 : index
    %c0_16 = arith.constant 0 : index
    %19 = vector.load %arg5[%c0_15, %c0_16] : memref<1x128xf32, #tpu.memory_space<vmem>>, vector<1x128xf32>
    %20 = vector.broadcast %19 : vector<1x128xf32> to vector<16x128xf32>
    %21 = arith.addf %18, %20 : vector<16x128xf32>
    %cst_17 = arith.constant 0.000000e+00 : f32
    %22 = vector.broadcast %cst_17 : f32 to vector<16x128xf32>
    %23 = arith.maximumf %21, %22 : vector<16x128xf32>
    %24 = arith.truncf %23 : vector<16x128xf32> to vector<16x128xbf16>
    %c0_18 = arith.constant 0 : index
    %c0_19 = arith.constant 0 : index
    %25 = vector.load %arg6[%c0_18, %c0_19] : memref<128x128xbf16, #tpu.memory_space<vmem>>, vector<128x128xbf16>
    %cst_20 = arith.constant dense<0.000000e+00> : vector<16x128xf32>
    %26 = tpu.matmul %24, %25, %cst_20 {dimension_numbers = #tpu.dot_dimension_numbers<[1], [0], [0], [1], [0, 0, 1, 1], [], []>} : vector<16x128xbf16>, vector<128x128xbf16>, vector<16x128xf32> -> vector<16x128xf32>
    %c0_21 = arith.constant 0 : index
    %c0_22 = arith.constant 0 : index
    %27 = vector.load %arg7[%c0_21, %c0_22] : memref<1x128xf32, #tpu.memory_space<vmem>>, vector<1x128xf32>
    %28 = vector.broadcast %27 : vector<1x128xf32> to vector<16x128xf32>
    %29 = arith.addf %26, %28 : vector<16x128xf32>
    %30 = tpu.iota {dimensions = array<i32: 1>} : vector<16x128xi32>
    %c16_i32 = arith.constant 16 : i32
    %31 = vector.broadcast %c16_i32 : i32 to vector<16x128xi32>
    %32 = arith.cmpi slt, %30, %31 : vector<16x128xi32>
    %cst_23 = arith.constant -1.000000e+30 : f32
    %33 = vector.broadcast %cst_23 : f32 to vector<16x128xf32>
    %34 = arith.select %32, %29, %33 : vector<16x128xi1>, vector<16x128xf32>
    %cst_24 = arith.constant dense<0xFF800000> : vector<16xf32>
    %35 = vector.multi_reduction <maximumf>, %34, %cst_24 [1] : vector<16x128xf32> to vector<16xf32>
    %36 = vector.shape_cast %35 : vector<16xf32> to vector<16x1xf32>
    %37 = vector.broadcast %36 : vector<16x1xf32> to vector<16x128xf32>
    %38 = arith.subf %34, %37 : vector<16x128xf32>
    %39 = math.exp %38 : vector<16x128xf32>
    %cst_25 = arith.constant dense<0.000000e+00> : vector<16xf32>
    %40 = vector.multi_reduction <add>, %39, %cst_25 [1] : vector<16x128xf32> to vector<16xf32>
    %41 = vector.shape_cast %40 : vector<16xf32> to vector<16x1xf32>
    %42 = vector.broadcast %41 : vector<16x1xf32> to vector<16x128xf32>
    %43 = arith.divf %39, %42 : vector<16x128xf32>
    %c0_26 = arith.constant 0 : index
    %c0_27 = arith.constant 0 : index
    %44 = vector.load %arg8[%c0_26, %c0_27] : memref<16x128xf32, #tpu.memory_space<vmem>>, vector<16x128xf32>
    tpu.vector_store %arg8[%c0_26, %c0_27], %43 {strides = array<i32>} : memref<16x128xf32, #tpu.memory_space<vmem>>, vector<16x128xf32>,
    return
  }
  func.func @transform_0(%arg0: i32) -> (i32, i32) {
    %c0_i32 = arith.constant 0 : i32
    %c0_i32_0 = arith.constant 0 : i32
    return %arg0, %c0_i32 : i32, i32
  }
  func.func @transform_1(%arg0: i32) -> (i32, i32) {
    %c0_i32 = arith.constant 0 : i32
    %c0_i32_0 = arith.constant 0 : i32
    %c0_i32_1 = arith.constant 0 : i32
    return %c0_i32, %c0_i32_0 : i32, i32
  }
  func.func @transform_2(%arg0: i32) -> (i32, i32) {
    %c0_i32 = arith.constant 0 : i32
    %c0_i32_0 = arith.constant 0 : i32
    %c0_i32_1 = arith.constant 0 : i32
    return %c0_i32, %c0_i32_0 : i32, i32
  }
  func.func @transform_3(%arg0: i32) -> (i32, i32) {
    %c0_i32 = arith.constant 0 : i32
    %c0_i32_0 = arith.constant 0 : i32
    %c0_i32_1 = arith.constant 0 : i32
    return %c0_i32, %c0_i32_0 : i32, i32
  }
  func.func @transform_4(%arg0: i32) -> (i32, i32) {
    %c0_i32 = arith.constant 0 : i32
    %c0_i32_0 = arith.constant 0 : i32
    %c0_i32_1 = arith.constant 0 : i32
    return %c0_i32, %c0_i32_0 : i32, i32
  }
  func.func @transform_5(%arg0: i32) -> (i32, i32) {
    %c0_i32 = arith.constant 0 : i32
    %c0_i32_0 = arith.constant 0 : i32
    %c0_i32_1 = arith.constant 0 : i32
    return %c0_i32, %c0_i32_0 : i32, i32
  }
  func.func @transform_6(%arg0: i32) -> (i32, i32) {
    %c0_i32 = arith.constant 0 : i32
    %c0_i32_0 = arith.constant 0 : i32
    %c0_i32_1 = arith.constant 0 : i32
    return %c0_i32, %c0_i32_0 : i32, i32
  }
  func.func @transform_7(%arg0: i32) -> (i32, i32) {
    %c0_i32 = arith.constant 0 : i32
    %c0_i32_0 = arith.constant 0 : i32
    return %arg0, %c0_i32 : i32, i32
  }
}

</mosaic_0001>

<llo_original>
// kernel: tpu_custom_call.1
$region0: #{tpu_custom_call.1}
  #allocation0 [shape = 'u32[]', space=smem, size = 0x4, offset = 0x4, fixed_abs, tag = 'smem constant byte address 0x4 - core index']
  #allocation1 [shape = 'u32[144,128]{1,0:T(1,128)}', space=vmem, size = 0x12000, scoped, tag = 'internal scratch']
  %s0 = inlined_call_operand.hbm [shape: bf16[16,32], index: 0, kind: input, shape index: {}]
  %s1 = inlined_call_operand.hbm [shape: bf16[32,128], index: 1, kind: input, shape index: {}]
  %s2 = inlined_call_operand.vmem [shape: f32[1,128], index: 2, kind: input, shape index: {}]
  %s3 = inlined_call_operand.hbm [shape: bf16[128,128], index: 3, kind: input, shape index: {}]
  %s4 = inlined_call_operand.vmem [shape: f32[1,128], index: 4, kind: input, shape index: {}]
  %s5 = inlined_call_operand.hbm [shape: bf16[128,128], index: 5, kind: input, shape index: {}]
  %s6 = inlined_call_operand.vmem [shape: f32[1,128], index: 6, kind: input, shape index: {}]
  %s7 = inlined_call_operand.hbm [shape: f32[16,128], index: 7, kind: output, shape index: {}]
  %s8 = sld [smem:[#allocation0]]
  $region54: #{tpu_custom_call.1} parent=0
    _
  %s10 = ssub.s32 1, %s8
  %s11 = scalar_select 0, %s10, %s8
  $region1: #{tpu_custom_call.1} parent=0
    #allocation2 [shape = 'u8[4096]{0}', space=vmem, size = 0x1000, scoped, tag = 'input window, operand 0, single buffered']
    #allocation3 [shape = 's32[1]{0}', space=sflag, size = 0x4, scoped, tag = 'scoped memory for tpu_custom_call.1']
    #allocation4 [shape = 's32[1]{0}', space=sflag, size = 0x4, scoped, tag = 'scoped memory for tpu_custom_call.1']
    #allocation5 [shape = 'u8[8192]{0}', space=vmem, size = 0x2000, scoped, tag = 'input window, operand 1, single buffered']
    #allocation6 [shape = 's32[1]{0}', space=sflag, size = 0x4, scoped, tag = 'scoped memory for tpu_custom_call.1']
    #allocation7 [shape = 'u8[32768]{0}', space=vmem, size = 0x8000, scoped, tag = 'input window, operand 3, single buffered']
    #allocation8 [shape = 'u8[32768]{0}', space=vmem, size = 0x8000, scoped, tag = 'input window, operand 5, single buffered']
    #allocation9 [shape = 's32[1]{0}', space=sflag, size = 0x4, scoped, tag = 'scoped memory for tpu_custom_call.1']
    #allocation10 [shape = 'u8[8192]{0}', space=vmem, size = 0x2000, scoped, tag = 'output window, operand 0, single buffered']
    %12 = vsyncpa [#allocation3], 0
    %13 = vsyncpa [#allocation6], 0
    %14 = vsyncpa [#allocation9], 0
    %15 = vsyncpa [#allocation4], 0
    // Predicated region
    $region2: #{tpu_custom_call.1} parent=1 // pred_check
      _
    $region3: #{tpu_custom_call.1} parent=1 // pred_check_branch
      %17 = sbr.rel (0) target = $region5
    $region4: #{tpu_custom_call.1} parent=1 // pred_region
      %s19 = ssub.s32 128, 128
      %20 = vsyncadd [#allocation3], %s19
      %s21 = sshll.u32 [#allocation2], 4
      %s22 = int_to_ptr.vmem [resolvable:$true] %s21
      %27 = dma.hbm_to_vmem [thread:$0]  %s0, 128, %s22, [#allocation3], 64, 64, 4
    $region5: #{tpu_custom_call.1} parent=1 // pred_fallthru
      _
    // Predicated region
    $region6: #{tpu_custom_call.1} parent=1 // pred_check
      _
    $region7: #{tpu_custom_call.1} parent=1 // pred_check_branch
      %29 = sbr.rel (0) target = $region9
    $region8: #{tpu_custom_call.1} parent=1 // pred_region
      %s31 = ssub.s32 256, 256
      %32 = vsyncadd [#allocation6], %s31
      %s33 = sshll.u32 [#allocation5], 4
      %s34 = int_to_ptr.vmem [resolvable:$true] %s33
      %39 = dma.hbm_to_vmem [thread:$0]  %s1, 256, %s34, [#allocation6], 64, 64, 4
    $region9: #{tpu_custom_call.1} parent=1 // pred_fallthru
      _
    // Predicated region
    $region10: #{tpu_custom_call.1} parent=1 // pred_check
      _
    $region11: #{tpu_custom_call.1} parent=1 // pred_check_branch
      %41 = sbr.rel (0) target = $region13
    $region12: #{tpu_custom_call.1} parent=1 // pred_region
      _
    $region13: #{tpu_custom_call.1} parent=1 // pred_fallthru
      _
    // Predicated region
    $region14: #{tpu_custom_call.1} parent=1 // pred_check
      _
    $region15: #{tpu_custom_call.1} parent=1 // pred_check_branch
      %43 = sbr.rel (0) target = $region17
    $region16: #{tpu_custom_call.1} parent=1 // pred_region
      %s45 = ssub.s32 1024, 1024
      %46 = vsyncadd [#allocation6], %s45
      %s47 = sshll.u32 [#allocation7], 4
      %s48 = int_to_ptr.vmem [resolvable:$true] %s47
      %53 = dma.hbm_to_vmem [thread:$0]  %s3, 1024, %s48, [#allocation6], 64, 64, 4
    $region17: #{tpu_custom_call.1} parent=1 // pred_fallthru
      _
    // Predicated region
    $region18: #{tpu_custom_call.1} parent=1 // pred_check
      _
    $region19: #{tpu_custom_call.1} parent=1 // pred_check_branch
      %55 = sbr.rel (0) target = $region21
    $region20: #{tpu_custom_call.1} parent=1 // pred_region
      _
    $region21: #{tpu_custom_call.1} parent=1 // pred_fallthru
      _
    // Predicated region
    $region22: #{tpu_custom_call.1} parent=1 // pred_check
      _
    $region23: #{tpu_custom_call.1} parent=1 // pred_check_branch
      %57 = sbr.rel (0) target = $region25
    $region24: #{tpu_custom_call.1} parent=1 // pred_region
      %s59 = ssub.s32 1024, 1024
      %60 = vsyncadd [#allocation9], %s59
      %s61 = sshll.u32 [#allocation8], 4
      %s62 = int_to_ptr.vmem [resolvable:$true] %s61
      %67 = dma.hbm_to_vmem [thread:$0]  %s5, 1024, %s62, [#allocation9], 64, 64, 4
    $region25: #{tpu_custom_call.1} parent=1 // pred_fallthru
      _
    // Predicated region
    $region26: #{tpu_custom_call.1} parent=1 // pred_check
      _
    $region27: #{tpu_custom_call.1} parent=1 // pred_check_branch
      %69 = sbr.rel (0) target = $region29
    $region28: #{tpu_custom_call.1} parent=1 // pred_region
      _
    $region29: #{tpu_custom_call.1} parent=1 // pred_fallthru
      _
    // Predicated region
    $region30: #{tpu_custom_call.1} parent=1 // pred_check
      _
    $region31: #{tpu_custom_call.1} parent=1 // pred_check_branch
      %71 = sbr.rel (0) target = $region33
    $region32: #{tpu_custom_call.1} parent=1 // pred_region
      %72 = dma.done [#allocation3], 128
    $region33: #{tpu_custom_call.1} parent=1 // pred_fallthru
      _
    // Predicated region
    $region34: #{tpu_custom_call.1} parent=1 // pred_check
      _
    $region35: #{tpu_custom_call.1} parent=1 // pred_check_branch
      %74 = sbr.rel (0) target = $region37
    $region36: #{tpu_custom_call.1} parent=1 // pred_region
      %75 = dma.done [#allocation6], 256
    $region37: #{tpu_custom_call.1} parent=1 // pred_fallthru
      _
    // Predicated region
    $region38: #{tpu_custom_call.1} parent=1 // pred_check
      _
    $region39: #{tpu_custom_call.1} parent=1 // pred_check_branch
      %77 = sbr.rel (0) target = $region41
    $region40: #{tpu_custom_call.1} parent=1 // pred_region
      %78 = dma.done [#allocation6], 1024
    $region41: #{tpu_custom_call.1} parent=1 // pred_fallthru
      _
    // Predicated region
    $region42: #{tpu_custom_call.1} parent=1 // pred_check
      _
    $region43: #{tpu_custom_call.1} parent=1 // pred_check_branch
      %80 = sbr.rel (0) target = $region45
    $region44: #{tpu_custom_call.1} parent=1 // pred_region
      %81 = dma.done [#allocation9], 1024
    $region45: #{tpu_custom_call.1} parent=1 // pred_fallthru
      _
    %v83 = vld [vmem:[#allocation2] sm:$0xf]
    %v84 = vld [vmem:[#allocation2 + $0x4] sm:$0xf]
    %v85 = vld [vmem:[#allocation5] sm:$0xf]
    %v86 = vld [vmem:[#allocation5 + $0x4] sm:$0xf]
    %v87 = vld [vmem:[#allocation5 + $0x8] sm:$0xf]
    %v88 = vld [vmem:[#allocation5 + $0xc] sm:$0xf]
    %v89 = vld [vmem:[%s2] sm:$0x1]
    %v91 = vlaneseq
    %v92 = vshrl.u32 %v91, 7
    %v93 = vsub.s32 0, %v92
    %v94 = vrot.slane %v89, %v93
    %v98 = vunpack.c.l.b16 %v83
    %v99 = vunpack.c.l.b16 %v84
    %v100 = vpack.c.b16 %v99, %v98
    %v105 = vunpack.c.l.b16 %v85
    %v106 = vunpack.c.l.b16 %v86
    %v107 = vunpack.c.l.b16 %v87
    %v108 = vunpack.c.l.b16 %v88
    %v109 = vpack.c.b16 %v106, %v105
    %v110 = vpack.c.b16 %v108, %v107
    %vm113 = vcmask 261120
    %v115 = vsel %vm113, %v100, 0
    %117 = vmatprep.subr.bf16.mxu0 0
    %118 = vmatpush1.bf16.msra.mxu0 0
    %119 = vmatprep.subr.bf16.mxu0 0
    %120 = vmatpush1.bf16.msra.mxu0 0
    %121 = vmatprep.subr.bf16.mxu0 0
    %122 = vmatpush1.bf16.msra.mxu0 0
    %123 = vmatprep.subr.bf16.mxu0 0
    %124 = vmatpush1.bf16.msra.mxu0 0
    %125 = vmatprep.subr.bf16.mxu0 0
    %126 = vmatpush1.bf16.msra.mxu0 0
    %127 = vmatprep.subr.bf16.mxu0 0
    %128 = vmatpush1.bf16.msra.mxu0 0
    %129 = vmatprep.subr.bf16.mxu0 0
    %130 = vmatpush1.bf16.msra.mxu0 %v110
    %131 = vmatprep.subr.bf16.mxu0 0
    %132 = vmatpush1.bf16.msra.mxu0 %v109
    %133 = vmatprep.subr.bf16.mxu0 0
    %134 = vmatpush2.bf16.msra.mxu0 0
    %135 = vmatprep.subr.bf16.mxu0 0
    %136 = vmatpush2.bf16.msra.mxu0 0
    %137 = vmatprep.subr.bf16.mxu0 0
    %138 = vmatpush2.bf16.msra.mxu0 0
    %139 = vmatprep.subr.bf16.mxu0 0
    %140 = vmatpush2.bf16.msra.mxu0 0
    %141 = vmatprep.subr.bf16.mxu0 0
    %142 = vmatpush2.bf16.msra.mxu0 0
    %143 = vmatprep.subr.bf16.mxu0 0
    %144 = vmatpush2.bf16.msra.mxu0 0
    %145 = vmatprep.subr.bf16.mxu0 0
    %146 = vmatpush2.bf16.msra.mxu0 0
    %147 = vmatprep.subr.bf16.mxu0 0
    %148 = vmatpush2.bf16.msra.mxu0 0
    %149 = vmatprep.mubr.bf16.mxu0 0
    %150 = vmatmul.mubr.bf16.gmra.mxu0 %v115
    %v151 = vpop.f32.mrf.mxu0
    %v152 = vadd.f32 %v94, %v151
    %v153 = vpop.f32.mrf.mxu0
    %v154 = vpop.f32.mrf.mxu0
    %v155 = vadd.f32 %v94, %v154
    %v156 = vpop.f32.mrf.mxu0
    %157 = vdwg.mxu0
    %v158 = vmax.f32 %v152, 0.0
    %v159 = vmax.f32 %v155, 0.0
    %v160 = vpack.c.bf16 %v159, %v158
    %v161 = vld [vmem:[#allocation7] sm:$0xf]
    %v162 = vld [vmem:[#allocation7 + $0x4] sm:$0xf]
    %v163 = vld [vmem:[#allocation7 + $0x8] sm:$0xf]
    %v164 = vld [vmem:[#allocation7 + $0xc] sm:$0xf]
    %v165 = vld [vmem:[#allocation7 + $0x10] sm:$0xf]
    %v166 = vld [vmem:[#allocation7 + $0x14] sm:$0xf]
    %v167 = vld [vmem:[#allocation7 + $0x18] sm:$0xf]
    %v168 = vld [vmem:[#allocation7 + $0x1c] sm:$0xf]
    %v169 = vld [vmem:[#allocation7 + $0x20] sm:$0xf]
    %v170 = vld [vmem:[#allocation7 + $0x24] sm:$0xf]
    %v171 = vld [vmem:[#allocation7 + $0x28] sm:$0xf]
    %v172 = vld [vmem:[#allocation7 + $0x2c] sm:$0xf]
    %v173 = vld [vmem:[#allocation7 + $0x30] sm:$0xf]
    %v174 = vld [vmem:[#allocation7 + $0x34] sm:$0xf]
    %v175 = vld [vmem:[#allocation7 + $0x38] sm:$0xf]
    %v176 = vld [vmem:[#allocation7 + $0x3c] sm:$0xf]
    %v177 = vld [vmem:[%s4] sm:$0x1]
    %v179 = vlaneseq
    %v180 = vshrl.u32 %v179, 7
    %v181 = vsub.s32 0, %v180
    %v182 = vrot.slane %v177, %v181
    %v200 = vunpack.c.l.b16 %v161
    %v201 = vunpack.c.l.b16 %v162
    %v202 = vunpack.c.l.b16 %v163
    %v203 = vunpack.c.l.b16 %v164
    %v204 = vunpack.c.l.b16 %v165
    %v205 = vunpack.c.l.b16 %v166
    %v206 = vunpack.c.l.b16 %v167
    %v207 = vunpack.c.l.b16 %v168
    %v208 = vunpack.c.l.b16 %v169
    %v209 = vunpack.c.l.b16 %v170
    %v210 = vunpack.c.l.b16 %v171
    %v211 = vunpack.c.l.b16 %v172
    %v212 = vunpack.c.l.b16 %v173
    %v213 = vunpack.c.l.b16 %v174
    %v214 = vunpack.c.l.b16 %v175
    %v215 = vunpack.c.l.b16 %v176
    %v216 = vpack.c.b16 %v201, %v200
    %v217 = vpack.c.b16 %v203, %v202
    %v218 = vpack.c.b16 %v205, %v204
    %v219 = vpack.c.b16 %v207, %v206
    %v220 = vpack.c.b16 %v209, %v208
    %v221 = vpack.c.b16 %v211, %v210
    %v222 = vpack.c.b16 %v213, %v212
    %v223 = vpack.c.b16 %v215, %v214
    %232 = vmatprep.subr.bf16.mxu0 0
    %233 = vmatpush1.bf16.msra.mxu0 %v223
    %234 = vmatprep.subr.bf16.mxu0 0
    %235 = vmatpush1.bf16.msra.mxu0 %v222
    %236 = vmatprep.subr.bf16.mxu0 0
    %237 = vmatpush1.bf16.msra.mxu0 %v221
    %238 = vmatprep.subr.bf16.mxu0 0
    %239 = vmatpush1.bf16.msra.mxu0 %v220
    %240 = vmatprep.subr.bf16.mxu0 0
    %241 = vmatpush1.bf16.msra.mxu0 %v219
    %242 = vmatprep.subr.bf16.mxu0 0
    %243 = vmatpush1.bf16.msra.mxu0 %v218
    %244 = vmatprep.subr.bf16.mxu0 0
    %245 = vmatpush1.bf16.msra.mxu0 %v217
    %246 = vmatprep.subr.bf16.mxu0 0
    %247 = vmatpush1.bf16.msra.mxu0 %v216
    %248 = vmatprep.subr.bf16.mxu0 0
    %249 = vmatpush2.bf16.msra.mxu0 0
    %250 = vmatprep.subr.bf16.mxu0 0
    %251 = vmatpush2.bf16.msra.mxu0 0
    %252 = vmatprep.subr.bf16.mxu0 0
    %253 = vmatpush2.bf16.msra.mxu0 0
    %254 = vmatprep.subr.bf16.mxu0 0
    %255 = vmatpush2.bf16.msra.mxu0 0
    %256 = vmatprep.subr.bf16.mxu0 0
    %257 = vmatpush2.bf16.msra.mxu0 0
    %258 = vmatprep.subr.bf16.mxu0 0
    %259 = vmatpush2.bf16.msra.mxu0 0
    %260 = vmatprep.subr.bf16.mxu0 0
    %261 = vmatpush2.bf16.msra.mxu0 0
    %262 = vmatprep.subr.bf16.mxu0 0
    %263 = vmatpush2.bf16.msra.mxu0 0
    %264 = vmatprep.mubr.bf16.mxu0 0
    %265 = vmatmul.mubr.bf16.gmra.mxu0 %v160
    %v266 = vpop.f32.mrf.mxu0
    %v267 = vadd.f32 %v182, %v266
    %v268 = vpop.f32.mrf.mxu0
    %v269 = vpop.f32.mrf.mxu0
    %v270 = vadd.f32 %v182, %v269
    %v271 = vpop.f32.mrf.mxu0
    %272 = vdwg.mxu0
    %v273 = vmax.f32 %v267, 0.0
    %v274 = vmax.f32 %v270, 0.0
    %v275 = vpack.c.bf16 %v274, %v273
    %276 = vmatprep.subr.bf16.mxu0 0
    %277 = vmatpush1.bf16.msra.mxu0 %v223
    %278 = vmatprep.subr.bf16.mxu0 0
    %279 = vmatpush1.bf16.msra.mxu0 %v222
    %280 = vmatprep.subr.bf16.mxu0 0
    %281 = vmatpush1.bf16.msra.mxu0 %v221
    %282 = vmatprep.subr.bf16.mxu0 0
    %283 = vmatpush1.bf16.msra.mxu0 %v220
    %284 = vmatprep.subr.bf16.mxu0 0
    %285 = vmatpush1.bf16.msra.mxu0 %v219
    %286 = vmatprep.subr.bf16.mxu0 0
    %287 = vmatpush1.bf16.msra.mxu0 %v218
    %288 = vmatprep.subr.bf16.mxu0 0
    %289 = vmatpush1.bf16.msra.mxu0 %v217
    %290 = vmatprep.subr.bf16.mxu0 0
    %291 = vmatpush1.bf16.msra.mxu0 %v216
    %292 = vmatprep.subr.bf16.mxu0 0
    %293 = vmatpush2.bf16.msra.mxu0 0
    %294 = vmatprep.subr.bf16.mxu0 0
    %295 = vmatpush2.bf16.msra.mxu0 0
    %296 = vmatprep.subr.bf16.mxu0 0
    %297 = vmatpush2.bf16.msra.mxu0 0
    %298 = vmatprep.subr.bf16.mxu0 0
    %299 = vmatpush2.bf16.msra.mxu0 0
    %300 = vmatprep.subr.bf16.mxu0 0
    %301 = vmatpush2.bf16.msra.mxu0 0
    %302 = vmatprep.subr.bf16.mxu0 0
    %303 = vmatpush2.bf16.msra.mxu0 0
    %304 = vmatprep.subr.bf16.mxu0 0
    %305 = vmatpush2.bf16.msra.mxu0 0
    %306 = vmatprep.subr.bf16.mxu0 0
    %307 = vmatpush2.bf16.msra.mxu0 0
    %308 = vmatprep.mubr.bf16.mxu0 0
    %309 = vmatmul.mubr.bf16.gmra.mxu0 %v275
    %v310 = vpop.f32.mrf.mxu0
    %v311 = vadd.f32 %v182, %v310
    %v312 = vpop.f32.mrf.mxu0
    %v313 = vpop.f32.mrf.mxu0
    %v314 = vadd.f32 %v182, %v313
    %v315 = vpop.f32.mrf.mxu0
    %316 = vdwg.mxu0
    %v317 = vmax.f32 %v311, 0.0
    %v318 = vmax.f32 %v314, 0.0
    %v319 = vpack.c.bf16 %v318, %v317
    %v320 = vld [vmem:[#allocation8] sm:$0xf]
    %v321 = vld [vmem:[#allocation8 + $0x4] sm:$0xf]
    %v322 = vld [vmem:[#allocation8 + $0x8] sm:$0xf]
    %v323 = vld [vmem:[#allocation8 + $0xc] sm:$0xf]
    %v324 = vld [vmem:[#allocation8 + $0x10] sm:$0xf]
    %v325 = vld [vmem:[#allocation8 + $0x14] sm:$0xf]
    %v326 = vld [vmem:[#allocation8 + $0x18] sm:$0xf]
    %v327 = vld [vmem:[#allocation8 + $0x1c] sm:$0xf]
    %v328 = vld [vmem:[#allocation8 + $0x20] sm:$0xf]
    %v329 = vld [vmem:[#allocation8 + $0x24] sm:$0xf]
    %v330 = vld [vmem:[#allocation8 + $0x28] sm:$0xf]
    %v331 = vld [vmem:[#allocation8 + $0x2c] sm:$0xf]
    %v332 = vld [vmem:[#allocation8 + $0x30] sm:$0xf]
    %v333 = vld [vmem:[#allocation8 + $0x34] sm:$0xf]
    %v334 = vld [vmem:[#allocation8 + $0x38] sm:$0xf]
    %v335 = vld [vmem:[#allocation8 + $0x3c] sm:$0xf]
    %v336 = vld [vmem:[%s6] sm:$0x1]
    %v338 = vlaneseq
    %v339 = vshrl.u32 %v338, 7
    %v340 = vsub.s32 0, %v339
    %v341 = vrot.slane %v336, %v340
    %v359 = vunpack.c.l.b16 %v320
    %v360 = vunpack.c.l.b16 %v321
    %v361 = vunpack.c.l.b16 %v322
    %v362 = vunpack.c.l.b16 %v323
    %v363 = vunpack.c.l.b16 %v324
    %v364 = vunpack.c.l.b16 %v325
    %v365 = vunpack.c.l.b16 %v326
    %v366 = vunpack.c.l.b16 %v327
    %v367 = vunpack.c.l.b16 %v328
    %v368 = vunpack.c.l.b16 %v329
    %v369 = vunpack.c.l.b16 %v330
    %v370 = vunpack.c.l.b16 %v331
    %v371 = vunpack.c.l.b16 %v332
    %v372 = vunpack.c.l.b16 %v333
    %v373 = vunpack.c.l.b16 %v334
    %v374 = vunpack.c.l.b16 %v335
    %v375 = vpack.c.b16 %v360, %v359
    %v376 = vpack.c.b16 %v362, %v361
    %v377 = vpack.c.b16 %v364, %v363
    %v378 = vpack.c.b16 %v366, %v365
    %v379 = vpack.c.b16 %v368, %v367
    %v380 = vpack.c.b16 %v370, %v369
    %v381 = vpack.c.b16 %v372, %v371
    %v382 = vpack.c.b16 %v374, %v373
    %391 = vmatprep.subr.bf16.mxu0 0
    %392 = vmatpush1.bf16.msra.mxu0 %v382
    %393 = vmatprep.subr.bf16.mxu0 0
    %394 = vmatpush1.bf16.msra.mxu0 %v381
    %395 = vmatprep.subr.bf16.mxu0 0
    %396 = vmatpush1.bf16.msra.mxu0 %v380
    %397 = vmatprep.subr.bf16.mxu0 0
    %398 = vmatpush1.bf16.msra.mxu0 %v379
    %399 = vmatprep.subr.bf16.mxu0 0
    %400 = vmatpush1.bf16.msra.mxu0 %v378
    %401 = vmatprep.subr.bf16.mxu0 0
    %402 = vmatpush1.bf16.msra.mxu0 %v377
    %403 = vmatprep.subr.bf16.mxu0 0
    %404 = vmatpush1.bf16.msra.mxu0 %v376
    %405 = vmatprep.subr.bf16.mxu0 0
    %406 = vmatpush1.bf16.msra.mxu0 %v375
    %407 = vmatprep.subr.bf16.mxu0 0
    %408 = vmatpush2.bf16.msra.mxu0 0
    %409 = vmatprep.subr.bf16.mxu0 0
    %410 = vmatpush2.bf16.msra.mxu0 0
    %411 = vmatprep.subr.bf16.mxu0 0
    %412 = vmatpush2.bf16.msra.mxu0 0
    %413 = vmatprep.subr.bf16.mxu0 0
    %414 = vmatpush2.bf16.msra.mxu0 0
    %415 = vmatprep.subr.bf16.mxu0 0
    %416 = vmatpush2.bf16.msra.mxu0 0
    %417 = vmatprep.subr.bf16.mxu0 0
    %418 = vmatpush2.bf16.msra.mxu0 0
    %419 = vmatprep.subr.bf16.mxu0 0
    %420 = vmatpush2.bf16.msra.mxu0 0
    %421 = vmatprep.subr.bf16.mxu0 0
    %422 = vmatpush2.bf16.msra.mxu0 0
    %423 = vmatprep.mubr.bf16.mxu0 0
    %424 = vmatmul.mubr.bf16.gmra.mxu0 %v319
    %v425 = vpop.f32.mrf.mxu0
    %v426 = vadd.f32 %v341, %v425
    %v427 = vpop.f32.mrf.mxu0
    %v428 = vpop.f32.mrf.mxu0
    %v429 = vadd.f32 %v341, %v428
    %v430 = vpop.f32.mrf.mxu0
    %431 = vdwg.mxu0
    %v432 = vlaneseq
    %v433 = vand.u32 %v432, 127
    %vm434 = vcmp.lt.s32.totalorder %v433, 16
    %v435 = vsel %vm434, %v426, -1e+30
    %v436 = vsel %vm434, %v429, -1e+30
    %437 = vmax.xlane.f32.xlu0 %v435
    %v438 = vpop.xlane.xlu0 %437
    %439 = vmax.xlane.f32.xlu0 %v436
    %v440 = vpop.xlane.xlu0 %439
    %v441 = vsub.f32 %v435, %v438
    %v442 = vsub.f32 %v436, %v440
    %v443 = vmul.f32 %v441, 1.442695
    %v444 = vpow.pop %v443
    %v445 = vmul.f32 %v442, 1.442695
    %v446 = vpow.pop %v445
    %447 = vadd.xlane.f32.xlu0 %v444
    %v448 = vpop.xlane.xlu0 %447
    %449 = vadd.xlane.f32.xlu0 %v446
    %v450 = vpop.xlane.xlu0 %449
    %v451 = vrcp.pop %v448
    %v452 = vmul.f32 %v444, %v451
    %v453 = vrcp.pop %v450
    %v454 = vmul.f32 %v446, %v453
    %455 = vst [vmem:[#allocation10] sm:$0xff] %v452
    %456 = vst [vmem:[#allocation10 + $0x8] sm:$0xff] %v454
    // Predicated region
    $region46: #{tpu_custom_call.1} parent=1 // pred_check
      _
    $region47: #{tpu_custom_call.1} parent=1 // pred_check_branch
      %458 = sbr.rel (0) target = $region49
    $region48: #{tpu_custom_call.1} parent=1 // pred_region
      %s460 = ssub.s32 256, 256
      %461 = vsyncadd [#allocation4], %s460
      %s462 = sshll.u32 [#allocation10], 4
      %s463 = int_to_ptr.vmem [resolvable:$true] %s462
      %468 = dma.vmem_to_hbm [thread:$0]  %s463, 256, %s7, [#allocation4], 128, 128, 8
    $region49: #{tpu_custom_call.1} parent=1 // pred_fallthru
      _
    // Predicated region
    $region50: #{tpu_custom_call.1} parent=1 // pred_check
      _
    $region51: #{tpu_custom_call.1} parent=1 // pred_check_branch
      %470 = sbr.rel (0) target = $region53
    $region52: #{tpu_custom_call.1} parent=1 // pred_region
      %471 = dma.done [#allocation4], 256
    $region53: #{tpu_custom_call.1} parent=1 // pred_fallthru
      _
    %472 = vsyncpa [#allocation3], 1
    %473 = vsyncpa [#allocation6], 1
    %474 = vsyncpa [#allocation9], 1
    %475 = vsyncpa [#allocation4], 1

</llo_original>
